<compile_context>
chip_gen: v5e
topology: v5e:2x2
jax: 0.10.0
libtpu: 0.0.40
codegen_flags: <defaults>
</compile_context>

<pallas_src>
import functools

import jax
import jax.numpy as jnp
from jax.experimental import pallas as pl
from jax.experimental.pallas import tpu as pltpu


def router_kernel(labels_ref, x_ref, w_ref, logits_ref, probs_ref, loss_ref, acc_ref,
                  *, inv_s, inv_b, tb):
    # labels_ref: (B,)        int32 in SMEM (scalar prefetch)
    # x_ref:      (tb, ts, H) native dtype (e.g. bf16) in VMEM   -- one (b, s) tile
    # w_ref:      (E, H)      f32 in VMEM (nn.Linear layout)
    # logits_ref: (tb, E)     f32 out
    # probs_ref:  (tb, E)     f32 out
    # loss_ref:   (1, 1)      f32 out in SMEM (per-B-tile partial loss, already / B)
    # acc_ref:    (tb, H)     f32 VMEM scratch -- running sum over the S tiles
    #
    # All grid queries hoisted to the kernel top level (never inside pl.when).
    b_idx = pl.program_id(0)
    s_idx = pl.program_id(1)
    n_s = pl.num_programs(1)
    base = b_idx * tb

    @pl.when(s_idx == 0)
    def _():
        acc_ref[...] = jnp.zeros_like(acc_ref)

    # Accumulate this S-tile's partial sum in f32 (input stays bf16 on the wire).
    x = x_ref[...].astype(jnp.float32)            # (tb, ts, H)
    acc_ref[...] += jnp.sum(x, axis=1)            # (tb, H)

    @pl.when(s_idx == n_s - 1)
    def _():
        pooled_sum = acc_ref[...]                                   # (tb, H) f32
        w = w_ref[...].astype(jnp.float32)                          # (E, H)
        # logits = (sum_over_S @ W^T) * (1/S): fold the mean into the small (tb,E) scale.
        logits = jax.lax.dot_general(
            pooled_sum, w,
            dimension_numbers=(((1,), (1,)), ((), ())),
            preferred_element_type=jnp.float32) * inv_s             # (tb, E)
        logits_ref[...] = logits

        # Numerically stable softmax over experts.
        m = jnp.max(logits, axis=-1, keepdims=True)                 # (tb, 1)
        e = jnp.exp(logits - m)                                     # (tb, E)
        ssum = jnp.sum(e, axis=-1, keepdims=True)                   # (tb, 1)
        probs_ref[...] = e / ssum

        # Cross-entropy with integer targets read from SMEM (no one-hot input).
        lse = m + jnp.log(ssum)                                     # (tb, 1) logsumexp
        n_e = logits.shape[-1]
        col_iota = jax.lax.broadcasted_iota(jnp.int32, (1, n_e), 1)
        tgt_sum = jnp.float32(0.0)
        for r in range(tb):                                         # tb is small & static
            lbl = labels_ref[base + r]
            tgt_sum = tgt_sum + jnp.sum(
                jnp.where(col_iota == lbl, logits[r:r + 1, :], 0.0))
        # Partial loss for this B tile, pre-divided by B; wrapper sums the partials.
        loss_ref[0, 0] = (jnp.sum(lse) - tgt_sum) * inv_b


def _pick_seq_tile(S, tb, H, itemsize, budget_bytes=8 * 1024 * 1024):
    """Largest S tile (multiple of 8, divides S) whose x-tile fits a modest VMEM budget."""
    for cand in (1024, 512, 256, 128, 64, 32, 16, 8):
        if S % cand == 0 and tb * cand * H * itemsize <= budget_bytes:
            return cand
    return S  # fall back to the full sequence (small-S case)


def router_forward(hidden_states, weight_eh, task_labels):
    """hidden_states: (B, S, H) any float dtype (bf16 recommended);
    weight_eh: (E, H) f32 (PyTorch nn.Linear layout); task_labels: (B,) int32.
    Returns (logits (B,E) f32, probs (B,E) f32, loss scalar f32)."""
    B, S, H = hidden_states.shape
    E = weight_eh.shape[0]

    # Batch tile: second-to-last dim of the (tb, E) outputs must be a multiple of 8
    # or equal the full batch.
    tb = 8 if (B % 8 == 0) else B
    ts = _pick_seq_tile(S, tb, H, hidden_states.dtype.itemsize)
    nb = B // tb
    ns = S // ts

    kernel = functools.partial(
        router_kernel, inv_s=float(1.0 / S), inv_b=float(1.0 / B), tb=tb)

    cost = pl.CostEstimate(
        flops=2 * B * S * H + 2 * B * H * E,
        transcendentals=B * E,
        bytes_accessed=(B * S * H * hidden_states.dtype.itemsize
                        + E * H * weight_eh.dtype.itemsize
                        + 2 * B * E * 4 + B * 4),
    )

    logits, probs, loss_parts = pl.pallas_call(
        kernel,
        out_shape=(
            jax.ShapeDtypeStruct((B, E), jnp.float32),
            jax.ShapeDtypeStruct((B, E), jnp.float32),
            jax.ShapeDtypeStruct((nb, 1), jnp.float32),
        ),
        grid_spec=pltpu.PrefetchScalarGridSpec(
            num_scalar_prefetch=1,                       # task_labels -> SMEM
            grid=(nb, ns),                               # (batch tiles, seq tiles)
            in_specs=[
                pl.BlockSpec((tb, ts, H), lambda b, s, labels: (b, s, 0)),
                pl.BlockSpec((E, H), lambda b, s, labels: (0, 0)),
            ],
            out_specs=(
                pl.BlockSpec((tb, E), lambda b, s, labels: (b, 0)),
                pl.BlockSpec((tb, E), lambda b, s, labels: (b, 0)),
                pl.BlockSpec((1, 1), lambda b, s, labels: (b, 0),
                             memory_space=pltpu.MemorySpace.SMEM),
            ),
            scratch_shapes=[pltpu.VMEM((tb, H), jnp.float32)],
        ),
        compiler_params=pltpu.CompilerParams(
            # B tiles are independent -> megacore-shardable; S is the reduction axis.
            dimension_semantics=("parallel", "arbitrary"),
            vmem_limit_bytes=32 * 1024 * 1024,           # safe on v5e/v6e/v7x
        ),
        cost_estimate=cost,
    )(task_labels.astype(jnp.int32), hidden_states, weight_eh)

    loss = jnp.sum(loss_parts)   # partials are already divided by B
    return logits, probs, loss


def router_reference(hidden_states, weight_eh, task_labels):
    x = hidden_states.astype(jnp.float32)
    w = weight_eh.astype(jnp.float32)
    pooled = jnp.mean(x, axis=1)
    logits = pooled @ w.T
    probs = jax.nn.softmax(logits, axis=-1)
    logp = jax.nn.log_softmax(logits, axis=-1)
    onehot = jax.nn.one_hot(task_labels, w.shape[0], dtype=jnp.float32)
    loss = -jnp.mean(jnp.sum(onehot * logp, axis=-1))
    return logits, probs, loss


if __name__ == "__main__":
    B, S, H, E = 2, 8, 32, 4  # batch, seq, hidden (input_dim), num_experts

    key = jax.random.PRNGKey(0)
    k_x, k_w = jax.random.split(key)
    # Keep hidden_states bf16 on the wire (the kernel accumulates in f32).
    hidden_states = jax.random.normal(k_x, (B, S, H), dtype=jnp.float32).astype(jnp.bfloat16)
    # Router weight in nn.Linear(input_dim, num_experts, bias=False) layout: (E, H).
    weight_eh = (jax.random.normal(k_w, (E, H), dtype=jnp.float32) / jnp.sqrt(H)).astype(jnp.float32)
    task_labels = jnp.array([1, 3], dtype=jnp.int32)

    logits, probs, loss = router_forward(hidden_states, weight_eh, task_labels)
    jax.block_until_ready((logits, probs, loss))

    ref_logits, ref_probs, ref_loss = router_reference(hidden_states, weight_eh, task_labels)
    assert jnp.allclose(logits, ref_logits, atol=1e-3, rtol=1e-3), "logits mismatch"
    assert jnp.allclose(probs, ref_probs, atol=1e-3, rtol=1e-3), "probs mismatch"
    assert jnp.allclose(loss, ref_loss, atol=1e-3, rtol=1e-3), "loss mismatch"

    print("KERNEL_OK")
</pallas_src>

<mosaic_0001>
module attributes {stable_mosaic.version = 11 : i64} {
  func.func @router_kernel(%arg0: i32, %arg1: i32, %arg2: memref<2xi32, #tpu.memory_space<smem>>, %arg3: memref<2x8x32xbf16, #tpu.memory_space<vmem>>, %arg4: memref<4x32xf32, #tpu.memory_space<vmem>>, %arg5: memref<2x4xf32, #tpu.memory_space<vmem>>, %arg6: memref<2x4xf32, #tpu.memory_space<vmem>>, %arg7: memref<1x1xf32, #tpu.memory_space<smem>>, %arg8: memref<2x32xf32, #tpu.memory_space<vmem>>) attributes {dimension_semantics = [#tpu.dimension_semantics<parallel>, #tpu.dimension_semantics<arbitrary>], iteration_bounds = array<i64: 1, 1>, scalar_prefetch = 1 : i64, scratch_operands = 1 : i64, tpu.core_type = #tpu.core_type<tc>, window_params = [{transform_indices = @transform_0, window_bounds = array<i64: 2, 8, 32>}, {pipeline_mode = #tpu.pipeline_mode<synchronous>, transform_indices = @transform_1, window_bounds = array<i64: 4, 32>}, {transform_indices = @transform_2, window_bounds = array<i64: 2, 4>}, {transform_indices = @transform_3, window_bounds = array<i64: 2, 4>}, {transform_indices = @transform_4, window_bounds = array<i64: 1, 1>}]} {
    %c2_i32 = arith.constant 2 : i32
    %0 = arith.muli %arg0, %c2_i32 : i32
    %c0_i32 = arith.constant 0 : i32
    %1 = arith.cmpi eq, %arg1, %c0_i32 : i32
    %2 = arith.extui %1 : i1 to i32
    %c0_i32_0 = arith.constant 0 : i32
    %3 = arith.cmpi ne, %2, %c0_i32_0 : i32
    scf.if %3 {
      %cst_9 = arith.constant 0.000000e+00 : f32
      %13 = vector.broadcast %cst_9 : f32 to vector<2x32xf32>
      %c0_10 = arith.constant 0 : index
      %c0_11 = arith.constant 0 : index
      %14 = vector.load %arg8[%c0_10, %c0_11] : memref<2x32xf32, #tpu.memory_space<vmem>>, vector<2x32xf32>
      tpu.vector_store %arg8[%c0_10, %c0_11], %13 {strides = array<i32>} : memref<2x32xf32, #tpu.memory_space<vmem>>, vector<2x32xf32>,
    } else {
    }
    %c0 = arith.constant 0 : index
    %c0_1 = arith.constant 0 : index
    %c0_2 = arith.constant 0 : index
    %4 = vector.load %arg3[%c0, %c0_1, %c0_2] : memref<2x8x32xbf16, #tpu.memory_space<vmem>>, vector<2x8x32xbf16>
    %5 = arith.extf %4 : vector<2x8x32xbf16> to vector<2x8x32xf32>
    %c0_3 = arith.constant 0 : index
    %c0_4 = arith.constant 0 : index
    %6 = vector.load %arg8[%c0_3, %c0_4] : memref<2x32xf32, #tpu.memory_space<vmem>>, vector<2x32xf32>
    %cst = arith.constant dense<0.000000e+00> : vector<2x32xf32>
    %7 = vector.multi_reduction <add>, %5, %cst [1] : vector<2x8x32xf32> to vector<2x32xf32>
    %8 = arith.addf %6, %7 : vector<2x32xf32>
    %c0_5 = arith.constant 0 : index
    %c0_6 = arith.constant 0 : index
    %9 = vector.load %arg8[%c0_5, %c0_6] : memref<2x32xf32, #tpu.memory_space<vmem>>, vector<2x32xf32>
    tpu.vector_store %arg8[%c0_5, %c0_6], %8 {strides = array<i32>} : memref<2x32xf32, #tpu.memory_space<vmem>>, vector<2x32xf32>,
    %c0_i32_7 = arith.constant 0 : i32
    %10 = arith.cmpi eq, %arg1, %c0_i32_7 : i32
    %11 = arith.extui %10 : i1 to i32
    %c0_i32_8 = arith.constant 0 : i32
    %12 = arith.cmpi ne, %11, %c0_i32_8 : i32
    scf.if %12 {
      %c0_9 = arith.constant 0 : index
      %c0_10 = arith.constant 0 : index
      %13 = vector.load %arg8[%c0_9, %c0_10] : memref<2x32xf32, #tpu.memory_space<vmem>>, vector<2x32xf32>
      %c0_11 = arith.constant 0 : index
      %c0_12 = arith.constant 0 : index
      %14 = vector.load %arg4[%c0_11, %c0_12] : memref<4x32xf32, #tpu.memory_space<vmem>>, vector<4x32xf32>
      %cst_13 = arith.constant dense<0.000000e+00> : vector<2x4xf32>
      %15 = tpu.matmul %13, %14, %cst_13 {dimension_numbers = #tpu.dot_dimension_numbers<[1], [1], [0], [0], [0, 0, 1, 0], [], []>} : vector<2x32xf32>, vector<4x32xf32>, vector<2x4xf32> -> vector<2x4xf32>
      %cst_14 = arith.constant 1.250000e-01 : f32
      %16 = vector.broadcast %cst_14 : f32 to vector<2x4xf32>
      %17 = arith.mulf %15, %16 : vector<2x4xf32>
      %c0_15 = arith.constant 0 : index
      %c0_16 = arith.constant 0 : index
      %18 = vector.load %arg5[%c0_15, %c0_16] : memref<2x4xf32, #tpu.memory_space<vmem>>, vector<2x4xf32>
      tpu.vector_store %arg5[%c0_15, %c0_16], %17 {strides = array<i32>} : memref<2x4xf32, #tpu.memory_space<vmem>>, vector<2x4xf32>,
      %cst_17 = arith.constant dense<0xFF800000> : vector<2xf32>
      %19 = vector.multi_reduction <maximumf>, %17, %cst_17 [1] : vector<2x4xf32> to vector<2xf32>
      %20 = vector.shape_cast %19 : vector<2xf32> to vector<2x1xf32>
      %21 = vector.broadcast %20 : vector<2x1xf32> to vector<2x4xf32>
      %22 = arith.subf %17, %21 : vector<2x4xf32>
      %23 = math.exp %22 : vector<2x4xf32>
      %cst_18 = arith.constant dense<0.000000e+00> : vector<2xf32>
      %24 = vector.multi_reduction <add>, %23, %cst_18 [1] : vector<2x4xf32> to vector<2xf32>
      %25 = vector.shape_cast %24 : vector<2xf32> to vector<2x1xf32>
      %26 = vector.broadcast %25 : vector<2x1xf32> to vector<2x4xf32>
      %27 = arith.divf %23, %26 : vector<2x4xf32>
      %c0_19 = arith.constant 0 : index
      %c0_20 = arith.constant 0 : index
      %28 = vector.load %arg6[%c0_19, %c0_20] : memref<2x4xf32, #tpu.memory_space<vmem>>, vector<2x4xf32>
      tpu.vector_store %arg6[%c0_19, %c0_20], %27 {strides = array<i32>} : memref<2x4xf32, #tpu.memory_space<vmem>>, vector<2x4xf32>,
      %29 = math.log %25 : vector<2x1xf32>
      %30 = arith.addf %20, %29 : vector<2x1xf32>
      %31 = tpu.iota {dimensions = array<i32: 1>} : vector<1x4xi32>
      %c0_i32_21 = arith.constant 0 : i32
      %32 = arith.addi %0, %c0_i32_21 : i32
      %33 = arith.index_cast %32 : i32 to index
      %34 = memref.load %arg2[%33] : memref<2xi32, #tpu.memory_space<smem>>
      %35 = vector.broadcast %34 : i32 to vector<1x4xi32>
      %36 = arith.cmpi eq, %31, %35 : vector<1x4xi32>
      %37 = vector.extract_strided_slice %17 {offsets = [0, 0], sizes = [1, 4], strides = [1, 1]} : vector<2x4xf32> to vector<1x4xf32>
      %cst_22 = arith.constant 0.000000e+00 : f32
      %38 = vector.broadcast %cst_22 : f32 to vector<1x4xf32>
      %39 = arith.select %36, %37, %38 : vector<1x4xi1>, vector<1x4xf32>
      %40 = vector.shape_cast %39 : vector<1x4xf32> to vector<1x1x4xf32>
      %cst_23 = arith.constant dense<0.000000e+00> : vector<1xf32>
      %41 = vector.multi_reduction <add>, %40, %cst_23 [1, 2] : vector<1x1x4xf32> to vector<1xf32>
      %42 = vector.shape_cast %41 : vector<1xf32> to vector<1x1x1xf32>
      %43 = vector.extract %42[0, 0, 0] : f32 from vector<1x1x1xf32>
      %cst_24 = arith.constant 0.000000e+00 : f32
      %44 = arith.addf %cst_24, %43 : f32
      %c1_i32 = arith.constant 1 : i32
      %45 = arith.addi %0, %c1_i32 : i32
      %46 = arith.index_cast %45 : i32 to index
      %47 = memref.load %arg2[%46] : memref<2xi32, #tpu.memory_space<smem>>
      %48 = vector.broadcast %47 : i32 to vector<1x4xi32>
      %49 = arith.cmpi eq, %31, %48 : vector<1x4xi32>
      %50 = vector.extract_strided_slice %17 {offsets = [1, 0], sizes = [1, 4], strides = [1, 1]} : vector<2x4xf32> to vector<1x4xf32>
      %cst_25 = arith.constant 0.000000e+00 : f32
      %51 = vector.broadcast %cst_25 : f32 to vector<1x4xf32>
      %52 = arith.select %49, %50, %51 : vector<1x4xi1>, vector<1x4xf32>
      %53 = vector.shape_cast %52 : vector<1x4xf32> to vector<1x1x4xf32>
      %cst_26 = arith.constant dense<0.000000e+00> : vector<1xf32>
      %54 = vector.multi_reduction <add>, %53, %cst_26 [1, 2] : vector<1x1x4xf32> to vector<1xf32>
      %55 = vector.shape_cast %54 : vector<1xf32> to vector<1x1x1xf32>
      %56 = vector.extract %55[0, 0, 0] : f32 from vector<1x1x1xf32>
      %57 = arith.addf %44, %56 : f32
      %58 = vector.shape_cast %30 : vector<2x1xf32> to vector<1x2x1xf32>
      %cst_27 = arith.constant dense<0.000000e+00> : vector<1xf32>
      %59 = vector.multi_reduction <add>, %58, %cst_27 [1, 2] : vector<1x2x1xf32> to vector<1xf32>
      %60 = vector.shape_cast %59 : vector<1xf32> to vector<1x1x1xf32>
      %61 = vector.extract %60[0, 0, 0] : f32 from vector<1x1x1xf32>
      %62 = arith.subf %61, %57 : f32
      %cst_28 = arith.constant 5.000000e-01 : f32
      %63 = arith.mulf %62, %cst_28 : f32
      %c0_29 = arith.constant 0 : index
      %c0_30 = arith.constant 0 : index
      %64 = memref.load %arg7[%c0_29, %c0_30] : memref<1x1xf32, #tpu.memory_space<smem>>
      memref.store %63, %arg7[%c0_29, %c0_30] : memref<1x1xf32, #tpu.memory_space<smem>>
    } else {
    }
    return
  }
  func.func @transform_0(%arg0: i32, %arg1: i32, %arg2: memref<2xi32, #tpu.memory_space<smem>>) -> (i32, i32, i32) {
    %c0_i32 = arith.constant 0 : i32
    %c0_i32_0 = arith.constant 0 : i32
    return %arg0, %arg1, %c0_i32 : i32, i32, i32
  }
  func.func @transform_1(%arg0: i32, %arg1: i32, %arg2: memref<2xi32, #tpu.memory_space<smem>>) -> (i32, i32) {
    %c0_i32 = arith.constant 0 : i32
    %c0_i32_0 = arith.constant 0 : i32
    %c0_i32_1 = arith.constant 0 : i32
    return %c0_i32, %c0_i32_0 : i32, i32
  }
  func.func @transform_2(%arg0: i32, %arg1: i32, %arg2: memref<2xi32, #tpu.memory_space<smem>>) -> (i32, i32) {
    %c0_i32 = arith.constant 0 : i32
    %c0_i32_0 = arith.constant 0 : i32
    return %arg0, %c0_i32 : i32, i32
  }
  func.func @transform_3(%arg0: i32, %arg1: i32, %arg2: memref<2xi32, #tpu.memory_space<smem>>) -> (i32, i32) {
    %c0_i32 = arith.constant 0 : i32
    %c0_i32_0 = arith.constant 0 : i32
    return %arg0, %c0_i32 : i32, i32
  }
  func.func @transform_4(%arg0: i32, %arg1: i32, %arg2: memref<2xi32, #tpu.memory_space<smem>>) -> (i32, i32) {
    %c0_i32 = arith.constant 0 : i32
    %c0_i32_0 = arith.constant 0 : i32
    return %arg0, %c0_i32 : i32, i32
  }
}

</mosaic_0001>

<llo_original>
// kernel: tpu_custom_call.1
$region0: #{tpu_custom_call.1}
  #allocation0 [shape = 'u32[]', space=smem, size = 0x4, offset = 0x4, fixed_abs, tag = 'smem constant byte address 0x4 - core index']
  #allocation1 [shape = 'u32[72,128]{1,0:T(1,128)}', space=vmem, size = 0x9000, scoped, tag = 'internal scratch']
  #allocation2 [shape = 'f32[2,32]{1,0:T(2,128)}', space=vmem, size = 0x400, scoped, tag = 'scratch operand']
  #allocation3 [shape = 's32[1]{0}', space=sflag, size = 0x4, scoped, tag = 'scoped memory for tpu_custom_call.1']
  #allocation4 [shape = 'u8[512]{0}', space=smem, size = 0x200, scoped, tag = 'prefetched SMEM operand 0']
  %s0 = inlined_call_operand.hbm [shape: s32[2], index: 0, kind: input, shape index: {}]
  %s1 = inlined_call_operand.hbm [shape: bf16[2,8,32], index: 1, kind: input, shape index: {}]
  %s2 = inlined_call_operand.hbm [shape: f32[4,32], index: 2, kind: input, shape index: {}]
  %s3 = inlined_call_operand.hbm [shape: f32[2,4], index: 3, kind: output, shape index: {0}]
  %s4 = inlined_call_operand.hbm [shape: f32[2,4], index: 4, kind: output, shape index: {1}]
  %s5 = inlined_call_operand.hbm [shape: f32[1,1], index: 5, kind: output, shape index: {2}]
  %6 = xla_tuple %s3, %s4, %s5
  %s7 = sld [smem:[#allocation0]]
  $region50: #{tpu_custom_call.1} parent=0
    _
  %s9 = ssub.s32 1, %s7
  %s10 = scalar_select 0, %s9, %s7
  %s12 = sshll.u32 %s0, 4
  %s13 = int_to_ptr.hbm [resolvable:$true] %s12
  %15 = dma.hbm_to_smem %s13, 16, [#allocation4], [#allocation3]
  %17 = dma.done [#allocation3], 16
  %18 = sfence
  $region1: #{tpu_custom_call.1} parent=0
    #allocation5 [shape = 'u8[4096]{0}', space=vmem, size = 0x1000, scoped, tag = 'input window, operand 1, single buffered']
    #allocation6 [shape = 's32[1]{0}', space=sflag, size = 0x4, scoped, tag = 'scoped memory for tpu_custom_call.1']
    #allocation7 [shape = 's32[1]{0}', space=sflag, size = 0x4, scoped, tag = 'scoped memory for tpu_custom_call.1']
    #allocation8 [shape = 's32[1]{0}', space=sflag, size = 0x4, scoped, tag = 'scoped memory for tpu_custom_call.1']
    #allocation9 [shape = 'u8[2048]{0}', space=vmem, size = 0x800, scoped, tag = 'input window, operand 2, single buffered']
    #allocation10 [shape = 's32[1]{0}', space=sflag, size = 0x4, scoped, tag = 'scoped memory for tpu_custom_call.1']
    #allocation11 [shape = 'u8[1024]{0}', space=vmem, size = 0x400, scoped, tag = 'output window, operand 0, single buffered']
    #allocation12 [shape = 'u8[1024]{0}', space=vmem, size = 0x400, scoped, tag = 'output window, operand 1, single buffered']
    #allocation13 [shape = 's32[1]{0}', space=sflag, size = 0x4, scoped, tag = 'scoped memory for tpu_custom_call.1']
    #allocation14 [shape = 'u8[512]{0}', space=smem, size = 0x200, scoped, tag = 'output window, operand 2, single buffered']
    %19 = vsyncpa [#allocation6], 0
    %20 = vsyncpa [#allocation10], 0
    %21 = vsyncpa [#allocation7], 0
    %22 = vsyncpa [#allocation13], 0
    %23 = vsyncpa [#allocation8], 0
    // Predicated region
    $region2: #{tpu_custom_call.1} parent=1 // pred_check
      _
    $region3: #{tpu_custom_call.1} parent=1 // pred_check_branch
      %25 = sbr.rel (0) target = $region5
    $region4: #{tpu_custom_call.1} parent=1 // pred_region
      %27 = vsyncadd [#allocation6], 0
      %s28 = sshll.u32 %s1, 4
      %s29 = int_to_ptr.hbm [resolvable:$true] %s28
      %s30 = sshll.u32 [#allocation5], 4
      %s31 = int_to_ptr.vmem [resolvable:$true] %s30
      %36 = dma.hbm_to_vmem [thread:$0]  %s29, 128, %s31, [#allocation6], 64, 64, 4
    $region5: #{tpu_custom_call.1} parent=1 // pred_fallthru
      _
    // Predicated region
    $region6: #{tpu_custom_call.1} parent=1 // pred_check
      _
    $region7: #{tpu_custom_call.1} parent=1 // pred_check_branch
      %38 = sbr.rel (0) target = $region9
    $region8: #{tpu_custom_call.1} parent=1 // pred_region
      %40 = vsyncadd [#allocation10], 0
      %s42 = sshll.u32 %s2, 4
      %s43 = int_to_ptr.hbm [resolvable:$true] %s42
      %s44 = sshll.u32 [#allocation9], 4
      %s45 = int_to_ptr.vmem [resolvable:$true] %s44
      %47 = dma.hbm_to_vmem [thread:$0]  %s43, 64, %s45, [#allocation10]
    $region9: #{tpu_custom_call.1} parent=1 // pred_fallthru
      _
    // Predicated region
    $region10: #{tpu_custom_call.1} parent=1 // pred_check
      _
    $region11: #{tpu_custom_call.1} parent=1 // pred_check_branch
      %49 = sbr.rel (0) target = $region13
    $region12: #{tpu_custom_call.1} parent=1 // pred_region
      %51 = dma.done [#allocation6], 128
    $region13: #{tpu_custom_call.1} parent=1 // pred_fallthru
      _
    // Predicated region
    $region14: #{tpu_custom_call.1} parent=1 // pred_check
      _
    $region15: #{tpu_custom_call.1} parent=1 // pred_check_branch
      %53 = sbr.rel (0) target = $region17
    $region16: #{tpu_custom_call.1} parent=1 // pred_region
      %55 = dma.done [#allocation10], 64
    $region17: #{tpu_custom_call.1} parent=1 // pred_fallthru
      _
    %s56 = smul.u32 0, 2
    %p57 = scmp.eq.s32.totalorder 0, 0
    // Predicated region
    $region18: #{tpu_custom_call.1} parent=1 // pred_check
      %p58 = pneg %p57
    $region19: #{tpu_custom_call.1} parent=1 // pred_check_branch
      %60 = sbr.rel (%p58) target = $region21
    $region20: #{tpu_custom_call.1} parent=1 // pred_region
      %vm61 = vcmask 254976
      %62 = vst.msk [vmem:[#allocation2] sm:$0x3] %vm61, 0.0
    $region21: #{tpu_custom_call.1} parent=1 // pred_fallthru
      _
    %v63 = vld [vmem:[#allocation5] sm:$0xf]
    %v64 = vld [vmem:[#allocation5 + $0x4] sm:$0xf]
    %v65 = vunpack.c.l.bf16 %v63
    %v66 = vunpack.c.l.bf16 %v64
    %v67 = vld [vmem:[#allocation2] sm:$0x3]
    %vm68 = vcmask 261120
    %v69 = vsel %vm68, %v65, 0.0
    %v70 = vrot.slane %v69, 4
    %v71 = vadd.f32 %v69, %v70
    %v72 = vrot.slane %v71, 2
    %v73 = vadd.f32 %v71, %v72
    %v74 = vrot.slane %v73, 1
    %v75 = vadd.f32 %v73, %v74
    %v76 = vsel %vm68, %v66, 0.0
    %v77 = vrot.slane %v76, 4
    %v78 = vadd.f32 %v76, %v77
    %v79 = vrot.slane %v78, 2
    %v80 = vadd.f32 %v78, %v79
    %v81 = vrot.slane %v80, 1
    %v82 = vadd.f32 %v80, %v81
    %vm85 = vcmask 1041409
    %v86 = vsel %vm85, %v82, %v75
    %v88 = vadd.f32 %v67, %v86
    %vm89 = vcmask 254976
    %90 = vst.msk [vmem:[#allocation2] sm:$0x3] %vm89, %v88
    // Predicated region
    $region22: #{tpu_custom_call.1} parent=1 // pred_check
      %p91 = pneg %p57
    $region23: #{tpu_custom_call.1} parent=1 // pred_check_branch
      %93 = sbr.rel (%p91) target = $region25
    $region24: #{tpu_custom_call.1} parent=1 // pred_region
      %v94 = vld [vmem:[#allocation2] sm:$0x3]
      %v95 = vld [vmem:[#allocation9] sm:$0xf]
      %v97 = vsel %vm68, %v94, 0
      %v100 = vsel %vm68, %v95, 0
      %102 = vmatpush.xpose.msra.mxu0 0.0
      %103 = vmatpush.xpose.msra.mxu0 0.0
      %104 = vmatpush.xpose.msra.mxu0 0.0
      %105 = vmatpush.xpose.msra.mxu0 0.0
      %106 = vmatpush.xpose.msra.mxu0 0.0
      %107 = vmatpush.xpose.msra.mxu0 0.0
      %108 = vmatpush.xpose.msra.mxu0 0.0
      %109 = vmatpush.xpose.msra.mxu0 0.0
      %110 = vmatpush.xpose.msra.mxu0 0.0
      %111 = vmatpush.xpose.msra.mxu0 0.0
      %112 = vmatpush.xpose.msra.mxu0 0.0
      %113 = vmatpush.xpose.msra.mxu0 0.0
      %114 = vmatpush.xpose.msra.mxu0 0.0
      %115 = vmatpush.xpose.msra.mxu0 0.0
      %116 = vmatpush.xpose.msra.mxu0 0.0
      %117 = vmatpush.xpose.msra.mxu0 %v100
      %118 = vmatmul.f32.gmra.mxu0 %v97
      %v119 = vpop.f32.mrf.mxu0
      %v120 = vadd.f32 0.0, %v119
      %121 = vdwg.mxu0
      %v122 = vmul.f32 %v120, 0.125
      %vm123 = vcmask 25600
      %124 = vst.msk [vmem:[#allocation11] sm:$0x3] %vm123, %v122
      %v125 = vsel %vm123, %v122, -inf
      %126 = vmax.xlane.f32.xlu0 %v125
      %v127 = vpop.xlane.xlu0 %126
      %v128 = vsub.f32 %v122, %v127
      %v129 = vmul.f32 %v128, 1.442695
      %v130 = vpow.pop %v129
      %v131 = vsel %vm123, %v130, 0.0
      %132 = vadd.xlane.f32.xlu0 %v131
      %v133 = vpop.xlane.xlu0 %132
      %v134 = vrcp.pop %v133
      %v135 = vmul.f32 %v133, %v134
      %v136 = vsub.f32 1.0, %v135
      %v137 = vmul.f32 %v134, %v136
      %v138 = vadd.f32 %v134, %v137
      %vm139 = vweird.f32 %v133
      %vm140 = vweird.f32 %v134
      %vm141 = vmor %vm139, %vm140
      %v142 = vsel %vm141, %v134, %v138
      %v143 = vand.u32 2147483647, %v133
      %vm144 = vcmp.eq.f32.partialorder %v143, 8.507059e+37
      %v145 = vand.u32 %v133, 2147483648
      %v146 = vor.u32 1.1754944e-38, %v145
      %v147 = vsel %vm144, %v146, %v142
      %v148 = vmul.f32 %v130, %v147
      %149 = vst.msk [vmem:[#allocation12] sm:$0x3] %vm123, %v148
      %v150 = vlog2.pop %v133
      %v151 = vmul.f32 %v150, 0.6931472
      %v152 = vadd.f32 %v127, %v151
      %v153 = vlaneseq
      %v154 = vand.u32 %v153, 127
      %s155 = sld [smem:[#allocation4 + %s56]]
      %v156 = vstv %s155
      %vm157 = vcmp.eq.s32.totalorder %v154, %v156
      %v158 = vsel %vm157, %v122, 0.0
      %vm159 = vcmask 24576
      %v160 = vsel %vm159, %v158, 0.0
      %161 = vadd.xlane.f32.xlu0 %v160
      %v162 = vpop.xlane.xlu0 %161
      %v163 = vrot.slane %v162, 4
      %v164 = vadd.f32 %v162, %v163
      %v165 = vrot.slane %v164, 2
      %v166 = vadd.f32 %v164, %v165
      %v167 = vrot.slane %v166, 1
      %v168 = vadd.f32 %v166, %v167
      %s169 = vtos %v168
      %s170 = sadd.f32 %s169, 0.0
      %s171 = sadd.s32 %s56, 1
      %s172 = sld [smem:[#allocation4 + %s171]]
      %v173 = vstv %s172
      %vm174 = vcmp.eq.s32.totalorder %v154, %v173
      %v175 = vsel %vm174, %v122, 0.0
      %v177 = vrot.slane %v175, 1
      %v179 = vsel %vm159, %v177, 0.0
      %180 = vadd.xlane.f32.xlu0 %v179
      %v181 = vpop.xlane.xlu0 %180
      %v182 = vrot.slane %v181, 4
      %v183 = vadd.f32 %v181, %v182
      %v184 = vrot.slane %v183, 2
      %v185 = vadd.f32 %v183, %v184
      %v186 = vrot.slane %v185, 1
      %v187 = vadd.f32 %v185, %v186
      %s188 = vtos %v187
      %s189 = sadd.f32 %s170, %s188
      %vm190 = vcmask 1024
      %v191 = vsel %vm190, %v152, 0.0
      %192 = vadd.xlane.f32.xlu0 %v191
      %v193 = vpop.xlane.xlu0 %192
      %v194 = vrot.slane %v193, 4
      %v195 = vadd.f32 %v193, %v194
      %v196 = vrot.slane %v195, 2
      %v197 = vadd.f32 %v195, %v196
      %v198 = vrot.slane %v197, 1
      %v199 = vadd.f32 %v197, %v198
      %s200 = vtos %v199
      %s201 = ssub.f32 %s200, %s189
      %s202 = smul.f32 %s201, 0.5
      %s203 = scalar_lea.smem [#allocation14], 0
      %204 = sst [smem:[%s203]] %s202
    $region25: #{tpu_custom_call.1} parent=1 // pred_fallthru
      _
    // Predicated region
    $region26: #{tpu_custom_call.1} parent=1 // pred_check
      _
    $region27: #{tpu_custom_call.1} parent=1 // pred_check_branch
      %206 = sbr.rel (0) target = $region29
    $region28: #{tpu_custom_call.1} parent=1 // pred_region
      %208 = vsyncadd [#allocation7], 0
      %s210 = sshll.u32 [#allocation11], 4
      %s211 = int_to_ptr.vmem [resolvable:$true] %s210
      %s212 = sshll.u32 %s3, 4
      %s213 = int_to_ptr.hbm [resolvable:$true] %s212
      %215 = dma.vmem_to_hbm [thread:$0]  %s211, 32, %s213, [#allocation7]
    $region29: #{tpu_custom_call.1} parent=1 // pred_fallthru
      _
    // Predicated region
    $region30: #{tpu_custom_call.1} parent=1 // pred_check
      _
    $region31: #{tpu_custom_call.1} parent=1 // pred_check_branch
      %217 = sbr.rel (0) target = $region33
    $region32: #{tpu_custom_call.1} parent=1 // pred_region
      %219 = vsyncadd [#allocation13], 0
      %s221 = sshll.u32 [#allocation12], 4
      %s222 = int_to_ptr.vmem [resolvable:$true] %s221
      %s223 = sshll.u32 %s4, 4
      %s224 = int_to_ptr.hbm [resolvable:$true] %s223
      %226 = dma.vmem_to_hbm [thread:$0]  %s222, 32, %s224, [#allocation13]
    $region33: #{tpu_custom_call.1} parent=1 // pred_fallthru
      _
    // Predicated region
    $region34: #{tpu_custom_call.1} parent=1 // pred_check
      _
    $region35: #{tpu_custom_call.1} parent=1 // pred_check_branch
      %228 = sbr.rel (0) target = $region37
    $region36: #{tpu_custom_call.1} parent=1 // pred_region
      %230 = vsyncadd [#allocation8], 0
      %s232 = sshll.u32 %s5, 4
      %s233 = int_to_ptr.hbm [resolvable:$true] %s232
      %235 = dma.smem_to_hbm [#allocation14], 16, %s233, [#allocation8]
    $region37: #{tpu_custom_call.1} parent=1 // pred_fallthru
      _
    // Predicated region
    $region38: #{tpu_custom_call.1} parent=1 // pred_check
      _
    $region39: #{tpu_custom_call.1} parent=1 // pred_check_branch
      %237 = sbr.rel (0) target = $region41
    $region40: #{tpu_custom_call.1} parent=1 // pred_region
      %239 = dma.done [#allocation7], 32
    $region41: #{tpu_custom_call.1} parent=1 // pred_fallthru
      _
    // Predicated region
    $region42: #{tpu_custom_call.1} parent=1 // pred_check
      _
    $region43: #{tpu_custom_call.1} parent=1 // pred_check_branch
      %241 = sbr.rel (0) target = $region45
    $region44: #{tpu_custom_call.1} parent=1 // pred_region
      %243 = dma.done [#allocation13], 32
    $region45: #{tpu_custom_call.1} parent=1 // pred_fallthru
      _
    // Predicated region
    $region46: #{tpu_custom_call.1} parent=1 // pred_check
      _
    $region47: #{tpu_custom_call.1} parent=1 // pred_check_branch
      %245 = sbr.rel (0) target = $region49
    $region48: #{tpu_custom_call.1} parent=1 // pred_region
      %247 = dma.done [#allocation8], 16
    $region49: #{tpu_custom_call.1} parent=1 // pred_fallthru
      _
    %248 = sfence
    %249 = vsyncpa [#allocation6], 1
    %250 = vsyncpa [#allocation10], 1
    %251 = vsyncpa [#allocation7], 1
    %252 = vsyncpa [#allocation13], 1
    %253 = vsyncpa [#allocation8], 1

</llo_original>
